<compile_context>
chip_gen: v7x
topology: tpu7x:2x2x1
jax: 0.10.0
libtpu: 0.0.40
codegen_flags: <defaults>
</compile_context>

<pallas_src>
import functools

import jax
import jax.numpy as jnp
from jax import lax
from jax.experimental import pallas as pl
from jax.experimental.pallas import tpu as pltpu

LRELU_SLOPE = 0.1
DEFAULT_T_TILE = 512      # rows per time tile; sized to fit v7x's smaller VMEM


def get_padding(kernel_size: int, dilation: int) -> int:
    return (kernel_size * dilation - dilation) // 2


def _round_up(x: int, m: int) -> int:
    return ((x + m - 1) // m) * m


def _tile_sizes(t_out: int, halo: int, t_tile: int):
    """Pick (T_TILE, halo_pad, nT) with halo_pad | T_TILE, both multiples of 16."""
    halo_pad = max(16, pl.next_power_of_2(max(halo, 1)))
    T_TILE = _round_up(min(t_tile, _round_up(t_out, 16)), halo_pad)
    nT = pl.cdiv(t_out, T_TILE)
    return T_TILE, halo_pad, nT


def _leaky(x, slope):
    return jnp.where(x >= 0, x, x * slope)


# ---------------------------------------------------------------------------
# Kernel 1: generic stride-1 dilated Conv1d, T-tiled, single wide MXU matmul.
# ---------------------------------------------------------------------------
def _conv_wide_kernel(x_main_ref, x_halo_ref, w_ref, b_ref, o_ref, xw_ref, *,
                      K, dilation, T_TILE, Cout, pre_slope, post_tanh):
    # x_main_ref: (1, T_TILE, Cin) bf16   rows [t*T_TILE, (t+1)*T_TILE) of padded x
    # x_halo_ref: (1, H, Cin)      bf16   rows [(t+1)*T_TILE, (t+1)*T_TILE + H)
    # w_ref:      (Cin, K*Cout)    bf16   tap-major wide weight
    # b_ref:      (1, Cout)        f32
    # xw_ref:     (T_TILE+H, Cin)  bf16   scratch: assembled window
    tile = x_main_ref[0]
    halo = x_halo_ref[0]
    if pre_slope is not None:
        tile = _leaky(tile, pre_slope)
        halo = _leaky(halo, pre_slope)
    xw_ref[:T_TILE, :] = tile
    xw_ref[T_TILE:, :] = halo
    xw = xw_ref[...]                                           # (T_TILE+H, Cin)
    # All K taps in one MXU matmul; tap k lives in columns [k*Cout, (k+1)*Cout).
    y = jnp.dot(xw, w_ref[...], preferred_element_type=jnp.float32)
    acc = jnp.zeros((T_TILE, Cout), jnp.float32)
    for k in range(K):                                         # static tap combine
        acc = acc + y[k * dilation:k * dilation + T_TILE,
                      k * Cout:(k + 1) * Cout]
    acc = acc + b_ref[...]
    if post_tanh:
        acc = jnp.tanh(acc)
    o_ref[0] = acc.astype(o_ref.dtype)


def pallas_conv1d(x, w, b, *, dilation=1, pad_left=0, pad_right=0,
                  pre_slope=None, post_tanh=False, out_dtype=jnp.bfloat16,
                  t_tile=DEFAULT_T_TILE):
    """Stride-1 dilated Conv1d.  x: (B,T,Cin), w: (K,Cin,Cout), b: (Cout,)."""
    B, T, Cin = x.shape
    K, _, Cout = w.shape
    halo = dilation * (K - 1)
    T_out = T + pad_left + pad_right - halo
    assert T_out > 0, "negative output length"
    T_TILE, halo_pad, nT = _tile_sizes(T_out, halo, t_tile)
    Lp = nT * T_TILE + halo_pad
    xp = jnp.pad(x.astype(jnp.bfloat16),
                 ((0, 0), (pad_left, Lp - pad_left - T), (0, 0)))
    w_wide = jnp.transpose(w, (1, 0, 2)).reshape(Cin, K * Cout)
    w_wide = w_wide.astype(jnp.bfloat16)
    b_row = b.reshape(1, Cout).astype(jnp.float32)
    step = T_TILE // halo_pad
    kern = functools.partial(_conv_wide_kernel, K=K, dilation=dilation,
                             T_TILE=T_TILE, Cout=Cout, pre_slope=pre_slope,
                             post_tanh=post_tanh)
    out = pl.pallas_call(
        kern,
        out_shape=jax.ShapeDtypeStruct((B, nT * T_TILE, Cout), out_dtype),
        grid=(B, nT),
        in_specs=[
            pl.BlockSpec((1, T_TILE, Cin), lambda bi, ti: (bi, ti, 0)),
            pl.BlockSpec((1, halo_pad, Cin),
                         lambda bi, ti: (bi, (ti + 1) * step, 0)),
            pl.BlockSpec((Cin, K * Cout), lambda bi, ti: (0, 0)),
            pl.BlockSpec((1, Cout), lambda bi, ti: (0, 0)),
        ],
        out_specs=pl.BlockSpec((1, T_TILE, Cout), lambda bi, ti: (bi, ti, 0)),
        scratch_shapes=[pltpu.VMEM((T_TILE + halo_pad, Cin), jnp.bfloat16)],
        compiler_params=pltpu.CompilerParams(
            dimension_semantics=("parallel", "parallel")),
    )(xp, xp, w_wide, b_row)
    return out[:, :T_out, :]


# ---------------------------------------------------------------------------
# Kernel 2: fused ResBlock branch (lrelu -> conv1(dil=d) -> lrelu -> conv2 -> +x)
# ---------------------------------------------------------------------------
def _resblock_branch_kernel(x_main_ref, x_halo_ref, w1_ref, b1_ref, w2_ref,
                            b2_ref, o_ref, xw_ref, *, K, d, T_TILE, C, T_valid):
    p1 = d * (K - 1) // 2
    p2 = (K - 1) // 2
    Tm = T_TILE + 2 * p2                    # conv1 output rows conv2 needs
    xw_ref[:T_TILE, :] = x_main_ref[0]
    xw_ref[T_TILE:, :] = x_halo_ref[0]
    xw = xw_ref[...]                        # raw window (also used for residual)
    x1 = _leaky(xw, LRELU_SLOPE)
    y1 = jnp.dot(x1, w1_ref[...], preferred_element_type=jnp.float32)
    h = jnp.zeros((Tm, C), jnp.float32)
    for k in range(K):
        h = h + y1[k * d:k * d + Tm, k * C:(k + 1) * C]
    h = _leaky(h + b1_ref[...], LRELU_SLOPE)
    # conv2 zero-pads conv1's output: zero rows falling outside [0, T_valid).
    g = (pl.program_id(1) * T_TILE - p2
         + lax.broadcasted_iota(jnp.int32, (Tm, 1), 0))
    h = jnp.where((g >= 0) & (g < T_valid), h, 0.0)
    y2 = jnp.dot(h.astype(jnp.bfloat16), w2_ref[...],
                 preferred_element_type=jnp.float32)
    acc = jnp.zeros((T_TILE, C), jnp.float32)
    for k in range(K):
        acc = acc + y2[k:k + T_TILE, k * C:(k + 1) * C]
    acc = acc + b2_ref[...]
    res = xw_ref[p1 + p2:p1 + p2 + T_TILE, :].astype(jnp.float32)
    o_ref[0] = (acc + res).astype(o_ref.dtype)


def pallas_resblock_branch(x, w1, b1, dilation, w2, b2, t_tile=DEFAULT_T_TILE):
    """x: (B,T,C) bf16; w1,w2: (K,C,C); returns conv2(lrelu(conv1(lrelu(x)))) + x."""
    B, T, C = x.shape
    K = w1.shape[0]
    p1 = dilation * (K - 1) // 2
    p2 = (K - 1) // 2
    halo = 2 * (p1 + p2)
    T_TILE, halo_pad, nT = _tile_sizes(T, halo, t_tile)
    Lp = nT * T_TILE + halo_pad
    xp = jnp.pad(x.astype(jnp.bfloat16),
                 ((0, 0), (p1 + p2, Lp - (p1 + p2) - T), (0, 0)))
    w1w = jnp.transpose(w1, (1, 0, 2)).reshape(C, K * C).astype(jnp.bfloat16)
    w2w = jnp.transpose(w2, (1, 0, 2)).reshape(C, K * C).astype(jnp.bfloat16)
    b1r = b1.reshape(1, C).astype(jnp.float32)
    b2r = b2.reshape(1, C).astype(jnp.float32)
    step = T_TILE // halo_pad
    kern = functools.partial(_resblock_branch_kernel, K=K, d=dilation,
                             T_TILE=T_TILE, C=C, T_valid=T)
    out = pl.pallas_call(
        kern,
        out_shape=jax.ShapeDtypeStruct((B, nT * T_TILE, C), jnp.bfloat16),
        grid=(B, nT),
        in_specs=[
            pl.BlockSpec((1, T_TILE, C), lambda bi, ti: (bi, ti, 0)),
            pl.BlockSpec((1, halo_pad, C),
                         lambda bi, ti: (bi, (ti + 1) * step, 0)),
            pl.BlockSpec((C, K * C), lambda bi, ti: (0, 0)),
            pl.BlockSpec((1, C), lambda bi, ti: (0, 0)),
            pl.BlockSpec((C, K * C), lambda bi, ti: (0, 0)),
            pl.BlockSpec((1, C), lambda bi, ti: (0, 0)),
        ],
        out_specs=pl.BlockSpec((1, T_TILE, C), lambda bi, ti: (bi, ti, 0)),
        scratch_shapes=[pltpu.VMEM((T_TILE + halo_pad, C), jnp.bfloat16)],
        compiler_params=pltpu.CompilerParams(
            dimension_semantics=("parallel", "parallel")),
    )(xp, xp, w1w, b1r, w2w, b2r)
    return out[:, :T, :]


# ---------------------------------------------------------------------------
# ConvTranspose1d via polyphase decomposition -> single stride-1 conv.
# ---------------------------------------------------------------------------
def pallas_conv_transpose1d(x, w_t, b, *, stride, padding, pre_slope=None):
    """x: (B,T,Cin), w_t: PyTorch layout (Cin, Cout, K), b: (Cout,).

    Lowers nn.ConvTranspose1d(stride=s, padding=p) to one stride-1 conv with
    s*Cout output channels (one column block per output phase) followed by a
    free reshape.  Exact for the HiFi-GAN geometry p == (K - s)//2, K - s even,
    where the output length is exactly T*s."""
    B, T, Cin = x.shape
    _, Cout, K = w_t.shape
    s, p = stride, padding
    assert K >= s and 0 <= p < s and K - s == 2 * p, \
        "unsupported ConvTranspose1d geometry"
    J = -(-K // s)                       # taps per phase
    Kp = J + 1                           # unified tap count (phases differ by 1 shift)
    w_poly = jnp.zeros((Kp, Cin, s * Cout), w_t.dtype)
    for r in range(s):                   # output phase r -> columns [r*Cout,(r+1)*Cout)
        phi = (r + p) % s
        off = 1 if phi < p else 0
        j = 0
        while phi + j * s < K:
            kpp = (J - 1 + off) - j
            w_poly = w_poly.at[kpp, :, r * Cout:(r + 1) * Cout].set(
                w_t[:, :, phi + j * s])
            j += 1
    b_poly = jnp.tile(b, s)
    y = pallas_conv1d(x, w_poly, b_poly, dilation=1,
                      pad_left=J - 1, pad_right=1, pre_slope=pre_slope)
    # (B, T, s*Cout) -> interleave phases -> (B, T*s, Cout): pure reshape.
    return y.reshape(B, T * s, Cout)


# ---------------------------------------------------------------------------
# Deterministic synthetic parameters (not a checkpoint).
# ---------------------------------------------------------------------------
def _init_conv(key, K, Cin, Cout, scale=0.05):
    kw, kb = jax.random.split(key)
    w = jax.random.normal(kw, (K, Cin, Cout), jnp.float32) * scale
    b = jax.random.normal(kb, (Cout,), jnp.float32) * scale
    return w, b


def init_generator_params(key, n_mel, up_rates, up_ks, up_init_ch, rb_ks, rb_ds):
    keys = iter(jax.random.split(key, 512))
    params = {}
    params['conv_pre'] = _init_conv(next(keys), 7, n_mel, up_init_ch)

    params['ups'] = []
    for i, (u, k) in enumerate(zip(up_rates, up_ks)):
        cin = up_init_ch // 2 ** i
        cout = up_init_ch // 2 ** (i + 1)
        kw, kb = jax.random.split(next(keys))
        w_t = jax.random.normal(kw, (cin, cout, k), jnp.float32) * 0.05
        b = jax.random.normal(kb, (cout,), jnp.float32) * 0.05
        params['ups'].append((w_t, b, u, (k - u) // 2))

    params['resblocks'] = []
    for i in range(len(up_rates)):
        ch = up_init_ch // 2 ** (i + 1)
        for k, d in zip(rb_ks, rb_ds):
            convs1 = [_init_conv(next(keys), k, ch, ch) for _ in range(3)]
            convs2 = [_init_conv(next(keys), k, ch, ch) for _ in range(3)]
            params['resblocks'].append(
                {'k': k, 'd': tuple(d), 'convs1': convs1, 'convs2': convs2})

    ch = up_init_ch // 2 ** len(up_rates)
    params['conv_post'] = _init_conv(next(keys), 7, ch, 1)
    return params


# ---------------------------------------------------------------------------
# Forward pass (mirrors Generator.forward / ResBlock1.forward semantics).
# ---------------------------------------------------------------------------
def resblock1_forward(x, rb):
    for (w1, b1), (w2, b2), d in zip(rb['convs1'], rb['convs2'], rb['d']):
        x = pallas_resblock_branch(x, w1, b1, d, w2, b2)
    return x


def generator_forward(params, x_ncw, num_kernels, num_upsamples):
    # External input (B, n_mel, T) NCW -> internal channels-last bf16.
    x = jnp.transpose(x_ncw, (0, 2, 1)).astype(jnp.bfloat16)
    w, b = params['conv_pre']
    x = pallas_conv1d(x, w, b, dilation=1, pad_left=3, pad_right=3)
    for i in range(num_upsamples):
        w_t, b, stride, pad = params['ups'][i]
        # leaky_relu(LRELU_SLOPE) fused as the pre-activation of the upsample.
        x = pallas_conv_transpose1d(x, w_t, b, stride=stride, padding=pad,
                                    pre_slope=LRELU_SLOPE)
        xs = None
        for j in range(num_kernels):
            r = resblock1_forward(x, params['resblocks'][i * num_kernels + j])
            xs = r if xs is None else xs + r
        x = (xs * (1.0 / num_kernels)).astype(jnp.bfloat16)
    w, b = params['conv_post']
    # F.leaky_relu default slope (0.01) and tanh fused into the final conv.
    x = pallas_conv1d(x, w, b, dilation=1, pad_left=3, pad_right=3,
                      pre_slope=0.01, post_tanh=True, out_dtype=jnp.float32)
    return jnp.transpose(x, (0, 2, 1))      # (B, 1, T_final) NCW


if __name__ == "__main__":
    key = jax.random.PRNGKey(0)
    kx, kp = jax.random.split(key)

    # Small but shape-consistent HiFi-GAN config.
    n_mel_channels = 8
    upsample_rates = (2, 2)
    upsample_kernel_sizes = (4, 4)
    upsample_initial_channel = 32
    resblock_kernel_sizes = (3, 5)
    resblock_dilation_sizes = ((1, 3, 5), (1, 3, 5))

    B, T = 2, 8
    x = jax.random.normal(kx, (B, n_mel_channels, T), jnp.float32)

    params = init_generator_params(
        kp, n_mel_channels, upsample_rates, upsample_kernel_sizes,
        upsample_initial_channel, resblock_kernel_sizes,
        resblock_dilation_sizes)

    out = generator_forward(params, x,
                            num_kernels=len(resblock_kernel_sizes),
                            num_upsamples=len(upsample_rates))
    out = jax.block_until_ready(out)

    expected_T = T
    for u in upsample_rates:
        expected_T *= u
    assert out.shape == (B, 1, expected_T), out.shape
    assert bool(jnp.all(jnp.isfinite(out)))
    assert bool(jnp.all(jnp.abs(out) <= 1.0))  # tanh output range
    print("KERNEL_OK")
</pallas_src>

<mosaic_0001>
module attributes {stable_mosaic.version = 11 : i64} {
  func.func @_conv_wide_kernel(%arg0: i32, %arg1: i32, %arg2: memref<1x16x8xbf16, #tpu.memory_space<vmem>>, %arg3: memref<1x16x8xbf16, #tpu.memory_space<vmem>>, %arg4: memref<8x224xbf16, #tpu.memory_space<vmem>>, %arg5: memref<1x32xf32, #tpu.memory_space<vmem>>, %arg6: memref<1x16x32xbf16, #tpu.memory_space<vmem>>, %arg7: memref<32x8xbf16, #tpu.memory_space<vmem>>) attributes {dimension_semantics = [#tpu.dimension_semantics<parallel>, #tpu.dimension_semantics<parallel>], iteration_bounds = array<i64: 2, 1>, scalar_prefetch = 0 : i64, scratch_operands = 1 : i64, tpu.core_type = #tpu.core_type<tc>, window_params = [{transform_indices = @transform_0, window_bounds = array<i64: 1, 16, 8>}, {transform_indices = @transform_1, window_bounds = array<i64: 1, 16, 8>}, {pipeline_mode = #tpu.pipeline_mode<synchronous>, transform_indices = @transform_2, window_bounds = array<i64: 8, 224>}, {pipeline_mode = #tpu.pipeline_mode<synchronous>, transform_indices = @transform_3, window_bounds = array<i64: 1, 32>}, {transform_indices = @transform_4, window_bounds = array<i64: 1, 16, 32>}]} {
    %c0 = arith.constant 0 : index
    %c0_0 = arith.constant 0 : index
    %c0_1 = arith.constant 0 : index
    %0 = vector.load %arg2[%c0, %c0_0, %c0_1] : memref<1x16x8xbf16, #tpu.memory_space<vmem>>, vector<1x16x8xbf16>
    %1 = vector.shape_cast %0 : vector<1x16x8xbf16> to vector<16x8xbf16>
    %c0_2 = arith.constant 0 : index
    %c0_3 = arith.constant 0 : index
    %c0_4 = arith.constant 0 : index
    %2 = vector.load %arg3[%c0_2, %c0_3, %c0_4] : memref<1x16x8xbf16, #tpu.memory_space<vmem>>, vector<1x16x8xbf16>
    %3 = vector.shape_cast %2 : vector<1x16x8xbf16> to vector<16x8xbf16>
    %c0_5 = arith.constant 0 : index
    %c0_6 = arith.constant 0 : index
    %4 = vector.load %arg7[%c0_5, %c0_6] : memref<32x8xbf16, #tpu.memory_space<vmem>>, vector<16x8xbf16>
    tpu.vector_store %arg7[%c0_5, %c0_6], %1 {strides = array<i32>} : memref<32x8xbf16, #tpu.memory_space<vmem>>, vector<16x8xbf16>,
    %c16 = arith.constant 16 : index
    %c0_7 = arith.constant 0 : index
    %5 = vector.load %arg7[%c16, %c0_7] : memref<32x8xbf16, #tpu.memory_space<vmem>>, vector<16x8xbf16>
    tpu.vector_store %arg7[%c16, %c0_7], %3 {strides = array<i32>} : memref<32x8xbf16, #tpu.memory_space<vmem>>, vector<16x8xbf16>,
    %c0_8 = arith.constant 0 : index
    %c0_9 = arith.constant 0 : index
    %6 = vector.load %arg7[%c0_8, %c0_9] : memref<32x8xbf16, #tpu.memory_space<vmem>>, vector<32x8xbf16>
    %c0_10 = arith.constant 0 : index
    %c0_11 = arith.constant 0 : index
    %7 = vector.load %arg4[%c0_10, %c0_11] : memref<8x224xbf16, #tpu.memory_space<vmem>>, vector<8x224xbf16>
    %cst = arith.constant dense<0.000000e+00> : vector<32x224xf32>
    %8 = tpu.matmul %6, %7, %cst {dimension_numbers = #tpu.dot_dimension_numbers<[1], [0], [0], [1], [0, 0, 1, 1], [], []>} : vector<32x8xbf16>, vector<8x224xbf16>, vector<32x224xf32> -> vector<32x224xf32>
    %cst_12 = arith.constant 0.000000e+00 : f32
    %9 = vector.broadcast %cst_12 : f32 to vector<16x32xf32>
    %10 = vector.extract_strided_slice %8 {offsets = [0, 0], sizes = [16, 32], strides = [1, 1]} : vector<32x224xf32> to vector<16x32xf32>
    %11 = arith.addf %9, %10 : vector<16x32xf32>
    %12 = vector.extract_strided_slice %8 {offsets = [1, 32], sizes = [16, 32], strides = [1, 1]} : vector<32x224xf32> to vector<16x32xf32>
    %13 = arith.addf %11, %12 : vector<16x32xf32>
    %14 = vector.extract_strided_slice %8 {offsets = [2, 64], sizes = [16, 32], strides = [1, 1]} : vector<32x224xf32> to vector<16x32xf32>
    %15 = arith.addf %13, %14 : vector<16x32xf32>
    %16 = vector.extract_strided_slice %8 {offsets = [3, 96], sizes = [16, 32], strides = [1, 1]} : vector<32x224xf32> to vector<16x32xf32>
    %17 = arith.addf %15, %16 : vector<16x32xf32>
    %18 = vector.extract_strided_slice %8 {offsets = [4, 128], sizes = [16, 32], strides = [1, 1]} : vector<32x224xf32> to vector<16x32xf32>
    %19 = arith.addf %17, %18 : vector<16x32xf32>
    %20 = vector.extract_strided_slice %8 {offsets = [5, 160], sizes = [16, 32], strides = [1, 1]} : vector<32x224xf32> to vector<16x32xf32>
    %21 = arith.addf %19, %20 : vector<16x32xf32>
    %22 = vector.extract_strided_slice %8 {offsets = [6, 192], sizes = [16, 32], strides = [1, 1]} : vector<32x224xf32> to vector<16x32xf32>
    %23 = arith.addf %21, %22 : vector<16x32xf32>
    %c0_13 = arith.constant 0 : index
    %c0_14 = arith.constant 0 : index
    %24 = vector.load %arg5[%c0_13, %c0_14] : memref<1x32xf32, #tpu.memory_space<vmem>>, vector<1x32xf32>
    %25 = vector.broadcast %24 : vector<1x32xf32> to vector<16x32xf32>
    %26 = arith.addf %23, %25 : vector<16x32xf32>
    %27 = arith.truncf %26 : vector<16x32xf32> to vector<16x32xbf16>
    %c0_15 = arith.constant 0 : index
    %c0_16 = arith.constant 0 : index
    %c0_17 = arith.constant 0 : index
    %28 = vector.load %arg6[%c0_15, %c0_16, %c0_17] : memref<1x16x32xbf16, #tpu.memory_space<vmem>>, vector<1x16x32xbf16>
    %29 = vector.shape_cast %28 : vector<1x16x32xbf16> to vector<16x32xbf16>
    %30 = vector.shape_cast %27 : vector<16x32xbf16> to vector<1x16x32xbf16>
    tpu.vector_store %arg6[%c0_15, %c0_16, %c0_17], %30 {strides = array<i32>} : memref<1x16x32xbf16, #tpu.memory_space<vmem>>, vector<1x16x32xbf16>,
    return
  }
  func.func @transform_0(%arg0: i32, %arg1: i32) -> (i32, i32, i32) {
    %c0_i32 = arith.constant 0 : i32
    %c0_i32_0 = arith.constant 0 : i32
    return %arg0, %arg1, %c0_i32 : i32, i32, i32
  }
  func.func @transform_1(%arg0: i32, %arg1: i32) -> (i32, i32, i32) {
    %c1_i32 = arith.constant 1 : i32
    %0 = arith.addi %arg1, %c1_i32 : i32
    %c1_i32_0 = arith.constant 1 : i32
    %1 = arith.muli %0, %c1_i32_0 : i32
    %c0_i32 = arith.constant 0 : i32
    %c0_i32_1 = arith.constant 0 : i32
    return %arg0, %1, %c0_i32 : i32, i32, i32
  }
  func.func @transform_2(%arg0: i32, %arg1: i32) -> (i32, i32) {
    %c0_i32 = arith.constant 0 : i32
    %c0_i32_0 = arith.constant 0 : i32
    %c0_i32_1 = arith.constant 0 : i32
    return %c0_i32, %c0_i32_0 : i32, i32
  }
  func.func @transform_3(%arg0: i32, %arg1: i32) -> (i32, i32) {
    %c0_i32 = arith.constant 0 : i32
    %c0_i32_0 = arith.constant 0 : i32
    %c0_i32_1 = arith.constant 0 : i32
    return %c0_i32, %c0_i32_0 : i32, i32
  }
  func.func @transform_4(%arg0: i32, %arg1: i32) -> (i32, i32, i32) {
    %c0_i32 = arith.constant 0 : i32
    %c0_i32_0 = arith.constant 0 : i32
    return %arg0, %arg1, %c0_i32 : i32, i32, i32
  }
}

</mosaic_0001>

<llo_original>
// kernel: tpu_custom_call.1
$region0: #{tpu_custom_call.1}
  #allocation0 [shape = 'u32[]', space=smem, size = 0x4, offset = 0x4, fixed_abs, tag = 'smem constant byte address 0x4 - core index']
  #allocation1 [shape = 'u32[144,128]{1,0:T(1,128)}', space=vmem, size = 0x12000, scoped, tag = 'internal scratch']
  #allocation2 [shape = 'bf16[32,8]{1,0:T(16,128)(2,1)}', space=vmem, size = 0x2000, scoped, tag = 'scratch operand']
  %s0 = inlined_call_operand.vmem [shape: bf16[2,32,8], index: 0, kind: input, shape index: {}]
  %s1 = inlined_call_operand.vmem [shape: bf16[2,32,8], index: 1, kind: input, shape index: {}]
  %s2 = inlined_call_operand.vmem [shape: bf16[8,224], index: 2, kind: input, shape index: {}]
  %s3 = inlined_call_operand.vmem [shape: f32[1,32], index: 3, kind: input, shape index: {}]
  %s4 = inlined_call_operand.hbm [shape: bf16[2,16,32], index: 4, kind: output, shape index: {}]
  %s5 = sld [smem:[#allocation0]]
  $region49: #{tpu_custom_call.1} parent=0
    _
  %s7 = ssub.s32 1, %s5
  %s8 = scalar_select 0, %s7, %s5
  $region1: #{tpu_custom_call.1} parent=0
    #allocation3 [shape = 'u8[8192]{0}', space=vmem, size = 0x2000, scoped, tag = 'output window, operand 0']
    #allocation4 [shape = 's32[2]{0}', space=sflag, size = 0x8, scoped, tag = 'scoped memory for tpu_custom_call.1']
    %9 = vsyncpa [#allocation4], 0
    %s10 = scalar_lea.sflag [#allocation4], 1
    %11 = vsyncpa %s10, 0
    loop: start=0, step=1, limit=4
    $region2: #{tpu_custom_call.1} parent=1 // loop_pre_header
      _
    $region3: #{tpu_custom_call.1} parent=1 // loop_header
      %s13 = sphi 0, %s17
      %p14 = scmp.ge.s32.totalorder %s13, 4
      %s20 = sphi 0, %s32
      %s21 = sphi 0, %s28
      %s22 = sphi 0, %s20
      %s23 = sphi 0, %s21
      %s24 = sphi 0, %s22
      %s25 = sphi 0, %s23
      %s37 = sphi 0, %s39
      %s40 = sphi 0, %s37
      %s41 = sphi 0, %s40
      %s57 = sphi 0, %s41
      %s67 = sphi 0, %s69
      %s70 = sphi 0, %s67
      %s71 = sphi 0, %s70
      %s87 = sphi 0, %s71
      %s91 = sphi 0, %s91
      %s93 = sphi 0, %s91
      %s94 = sphi 0, %s93
      %s108 = sphi 0, %s94
      %s112 = sphi 0, %s112
      %s114 = sphi 0, %s112
      %s115 = sphi 0, %s114
      %s129 = sphi 0, %s115
      %s137 = sphi 0, %s139
      %s140 = sphi 0, %s137
      %s141 = sphi 0, %s140
      %s157 = sphi 0, %s141
    $region4: #{tpu_custom_call.1} parent=1 // loop_header_branch
      %16 = sbr.rel (%p14) target = $region8
    $region5: #{tpu_custom_call.1} parent=1 // loop_body
      %s18 = ssub.s32 %s13, 1
      %s19 = ssub.s32 %s13, 2
      %s26 = sadd.s32 1, %s21
      %p27 = scmp.ge.s32.totalorder %s26, 1
      %s28 = scalar_select %p27, 0, %s26
      %s29 = sadd.s32 1, %s20
      %s30 = scalar_select %p27, %s29, %s20
      %p31 = scmp.ge.s32.totalorder %s30, 2
      %s32 = scalar_select %p31, 0, %s30
      %s33 = ssub.s32 %s20, %s32
      %s34 = ssub.s32 %s21, %s28
      %s35 = sor.u32 %s33, %s34
      %p36 = scmp.eq.s32.totalorder %s35, 0
      %s38 = sadd.s32 %s37, 1
      %s39 = scalar_select %p36, %s37, %s38
      %p42 = pneg %p36
      %p43 = scmp.eq.s32.totalorder %s13, 1
      %p44 = por %p42, %p43
      %p45 = scmp.ne.s32.totalorder %s37, %s40
      %p46 = scmp.eq.s32.totalorder %s13, 0
      %p47 = por %p45, %p46
      %p48 = scmp.ne.s32.totalorder %s37, %s40
      %p49 = scmp.eq.s32.totalorder %s18, 1
      %p50 = por %p48, %p49
      %p51 = scmp.ne.s32.totalorder %s40, %s41
      %p52 = scmp.eq.s32.totalorder %s18, 0
      %p53 = por %p51, %p52
      %p54 = scmp.ne.s32.totalorder %s40, %s41
      %p55 = scmp.eq.s32.totalorder %s19, 1
      %p56 = por %p54, %p55
      %p58 = scmp.ne.s32.totalorder %s41, %s57
      %p59 = scmp.eq.s32.totalorder %s19, 0
      %p60 = por %p58, %p59
      %s61 = sadd.s32 %s21, 1
      %s62 = sadd.s32 %s28, 1
      %s63 = ssub.s32 %s20, %s32
      %s64 = ssub.s32 %s61, %s62
      %s65 = sor.u32 %s63, %s64
      %p66 = scmp.eq.s32.totalorder %s65, 0
      %s68 = sadd.s32 %s67, 1
      %s69 = scalar_select %p66, %s67, %s68
      %p72 = pneg %p66
      %p73 = scmp.eq.s32.totalorder %s13, 1
      %p74 = por %p72, %p73
      %p75 = scmp.ne.s32.totalorder %s67, %s70
      %p76 = scmp.eq.s32.totalorder %s13, 0
      %p77 = por %p75, %p76
      %p78 = scmp.ne.s32.totalorder %s67, %s70
      %p79 = scmp.eq.s32.totalorder %s18, 1
      %p80 = por %p78, %p79
      %p81 = scmp.ne.s32.totalorder %s70, %s71
      %p82 = scmp.eq.s32.totalorder %s18, 0
      %p83 = por %p81, %p82
      %p84 = scmp.ne.s32.totalorder %s70, %s71
      %p85 = scmp.eq.s32.totalorder %s19, 1
      %p86 = por %p84, %p85
      %p88 = scmp.ne.s32.totalorder %s71, %s87
      %p89 = scmp.eq.s32.totalorder %s19, 0
      %p90 = por %p88, %p89
      %s92 = sadd.s32 %s91, 1
      %p95 = scmp.eq.s32.totalorder %s13, 1
      %p96 = scmp.ne.s32.totalorder %s91, %s93
      %p97 = scmp.eq.s32.totalorder %s13, 0
      %p98 = por %p96, %p97
      %p99 = scmp.ne.s32.totalorder %s91, %s93
      %p100 = scmp.eq.s32.totalorder %s18, 1
      %p101 = por %p99, %p100
      %p102 = scmp.ne.s32.totalorder %s93, %s94
      %p103 = scmp.eq.s32.totalorder %s18, 0
      %p104 = por %p102, %p103
      %p105 = scmp.ne.s32.totalorder %s93, %s94
      %p106 = scmp.eq.s32.totalorder %s19, 1
      %p107 = por %p105, %p106
      %p109 = scmp.ne.s32.totalorder %s94, %s108
      %p110 = scmp.eq.s32.totalorder %s19, 0
      %p111 = por %p109, %p110
      %s113 = sadd.s32 %s112, 1
      %p116 = scmp.eq.s32.totalorder %s13, 1
      %p117 = scmp.ne.s32.totalorder %s112, %s114
      %p118 = scmp.eq.s32.totalorder %s13, 0
      %p119 = por %p117, %p118
      %p120 = scmp.ne.s32.totalorder %s112, %s114
      %p121 = scmp.eq.s32.totalorder %s18, 1
      %p122 = por %p120, %p121
      %p123 = scmp.ne.s32.totalorder %s114, %s115
      %p124 = scmp.eq.s32.totalorder %s18, 0
      %p125 = por %p123, %p124
      %p126 = scmp.ne.s32.totalorder %s114, %s115
      %p127 = scmp.eq.s32.totalorder %s19, 1
      %p128 = por %p126, %p127
      %p130 = scmp.ne.s32.totalorder %s115, %s129
      %p131 = scmp.eq.s32.totalorder %s19, 0
      %p132 = por %p130, %p131
      %s133 = ssub.s32 %s20, %s32
      %s134 = ssub.s32 %s21, %s28
      %s135 = sor.u32 %s133, %s134
      %p136 = scmp.eq.s32.totalorder %s135, 0
      %s138 = sadd.s32 %s137, 1
      %s139 = scalar_select %p136, %s137, %s138
      %p142 = pneg %p136
      %p143 = scmp.eq.s32.totalorder %s13, 1
      %p144 = por %p142, %p143
      %p145 = scmp.ne.s32.totalorder %s137, %s140
      %p146 = scmp.eq.s32.totalorder %s13, 0
      %p147 = por %p145, %p146
      %p148 = scmp.ne.s32.totalorder %s137, %s140
      %p149 = scmp.eq.s32.totalorder %s18, 1
      %p150 = por %p148, %p149
      %p151 = scmp.ne.s32.totalorder %s140, %s141
      %p152 = scmp.eq.s32.totalorder %s18, 0
      %p153 = por %p151, %p152
      %p154 = scmp.ne.s32.totalorder %s140, %s141
      %p155 = scmp.eq.s32.totalorder %s19, 1
      %p156 = por %p154, %p155
      %p158 = scmp.ne.s32.totalorder %s141, %s157
      %p159 = scmp.eq.s32.totalorder %s19, 0
      %p160 = por %p158, %p159
      %p161 = scmp.le.s32.totalorder 1, %s13
      %p162 = scmp.lt.s32.totalorder %s13, 3
      %p163 = pnand %p161, %p162
      %p164 = pneg %p163
      // Predicated region
      $region9: #{tpu_custom_call.1} parent=5 // pred_check
        _
      $region10: #{tpu_custom_call.1} parent=5 // pred_check_branch
        %166 = sbr.rel (%p163) target = $region12
      $region11: #{tpu_custom_call.1} parent=5 // pred_region
        %s167 = ssub.s32 %s13, 1
        // Predicated region
        $region13: #{tpu_custom_call.1} parent=11 // pred_check
          %p168 = pneg %p104
        $region14: #{tpu_custom_call.1} parent=11 // pred_check_branch
          %170 = sbr.rel (%p168) target = $region16
        $region15: #{tpu_custom_call.1} parent=11 // pred_region
          _
        $region16: #{tpu_custom_call.1} parent=11 // pred_fallthru
          _
        // Predicated region
        $region17: #{tpu_custom_call.1} parent=11 // pred_check
          %p171 = pneg %p125
        $region18: #{tpu_custom_call.1} parent=11 // pred_check_branch
          %173 = sbr.rel (%p171) target = $region20
        $region19: #{tpu_custom_call.1} parent=11 // pred_region
          _
        $region20: #{tpu_custom_call.1} parent=11 // pred_fallthru
          _
      $region12: #{tpu_custom_call.1} parent=5 // pred_fallthru
        _
      %p174 = scmp.lt.s32.totalorder %s13, 2
      // Predicated region
      $region21: #{tpu_custom_call.1} parent=5 // pred_check
        %p175 = pneg %p174
      $region22: #{tpu_custom_call.1} parent=5 // pred_check_branch
        %177 = sbr.rel (%p175) target = $region24
      $region23: #{tpu_custom_call.1} parent=5 // pred_region
        // Predicated region
        $region25: #{tpu_custom_call.1} parent=23 // pred_check
          %p178 = pneg %p47
        $region26: #{tpu_custom_call.1} parent=23 // pred_check_branch
          %180 = sbr.rel (%p178) target = $region28
        $region27: #{tpu_custom_call.1} parent=23 // pred_region
          %s181 = smul.u32 2, %s21
          %p182 = scmp.lt.s32.totalorder %s20, 1
          %s183 = scalar_select %p182, %s20, 1
          %p184 = scmp.lt.s32.totalorder %s181, 3
          %s185 = scalar_select %p184, %s181, 3
          %s186 = smul.addr %s183, 4
          %s187 = sadd.s32 %s185, %s186
          %s188 = smul.addr %s187, 4
          %s189 = scalar_lea.vmem %s0, %s188
          %s190 = smul.u32 2, %s21
        $region28: #{tpu_custom_call.1} parent=23 // pred_fallthru
          _
        // Predicated region
        $region29: #{tpu_custom_call.1} parent=23 // pred_check
          %p191 = pneg %p77
        $region30: #{tpu_custom_call.1} parent=23 // pred_check_branch
          %193 = sbr.rel (%p191) target = $region32
        $region31: #{tpu_custom_call.1} parent=23 // pred_region
          %s194 = sadd.s32 %s21, 1
          %s195 = smul.u32 2, %s194
          %p196 = scmp.lt.s32.totalorder %s20, 1
          %s197 = scalar_select %p196, %s20, 1
          %p198 = scmp.lt.s32.totalorder %s195, 3
          %s199 = scalar_select %p198, %s195, 3
          %s200 = smul.addr %s197, 4
          %s201 = sadd.s32 %s199, %s200
          %s202 = smul.addr %s201, 4
          %s203 = scalar_lea.vmem %s1, %s202
          %s204 = sadd.s32 %s21, 1
          %s205 = smul.u32 2, %s204
        $region32: #{tpu_custom_call.1} parent=23 // pred_fallthru
          _
      $region24: #{tpu_custom_call.1} parent=5 // pred_fallthru
        _
      %p206 = scmp.le.s32.totalorder 1, %s13
      %p207 = scmp.lt.s32.totalorder %s13, 3
      %p208 = pnand %p206, %p207
      %p209 = pneg %p208
      // Predicated region
      $region33: #{tpu_custom_call.1} parent=5 // pred_check
        _
      $region34: #{tpu_custom_call.1} parent=5 // pred_check_branch
        %211 = sbr.rel (%p208) target = $region36
      $region35: #{tpu_custom_call.1} parent=5 // pred_region
        %s212 = ssub.s32 %s13, 1
        %s213 = smul.u32 2, %s23
        %p214 = scmp.lt.s32.totalorder %s22, 1
        %s215 = scalar_select %p214, %s22, 1
        %p216 = scmp.lt.s32.totalorder %s213, 3
        %s217 = scalar_select %p216, %s213, 3
        %s218 = smul.addr %s215, 4
        %s219 = sadd.s32 %s217, %s218
        %s220 = smul.addr %s219, 4
        %s221 = scalar_lea.vmem %s0, %s220
        %p222 = pneg %p53
        %p223 = pneg %p50
        %s224 = sadd.s32 %s23, 1
        %s225 = smul.u32 2, %s224
        %p226 = scmp.lt.s32.totalorder %s22, 1
        %s227 = scalar_select %p226, %s22, 1
        %p228 = scmp.lt.s32.totalorder %s225, 3
        %s229 = scalar_select %p228, %s225, 3
        %s230 = smul.addr %s227, 4
        %s231 = sadd.s32 %s229, %s230
        %s232 = smul.addr %s231, 4
        %s233 = scalar_lea.vmem %s1, %s232
        %p234 = pneg %p83
        %p235 = pneg %p80
        %p236 = pneg %p104
        %p237 = pneg %p101
        %p238 = pneg %p125
        %p239 = pneg %p122
        %p240 = pneg %p153
        %p241 = pneg %p150
        %s242 = sand.u32 %s140, 1
        %s243 = scalar_lea.sflag [#allocation4], %s242
        %s244 = sand.u32 %s140, 1
        %s245 = smul.addr %s244, 8
        %s246 = scalar_lea.vmem [#allocation3], %s245
        %s247 = smul.u32 2, %s23
        %p248 = scmp.lt.s32.totalorder %s22, 1
        %s249 = scalar_select %p248, %s22, 1
        %p250 = scmp.lt.s32.totalorder %s247, 3
        %s251 = scalar_select %p250, %s247, 3
        %s252 = smul.addr %s249, 4
        %s253 = sadd.s32 %s251, %s252
        %s254 = smul.addr %s253, 4
        %s255 = scalar_lea.vmem %s0, %s254
        %s256 = smul.u32 2, %s23
        %s257 = sadd.s32 %s23, 1
        %s258 = smul.u32 2, %s257
        %p259 = scmp.lt.s32.totalorder %s22, 1
        %s260 = scalar_select %p259, %s22, 1
        %p261 = scmp.lt.s32.totalorder %s258, 3
        %s262 = scalar_select %p261, %s258, 3
        %s263 = smul.addr %s260, 4
        %s264 = sadd.s32 %s262, %s263
        %s265 = smul.addr %s264, 4
        %s266 = scalar_lea.vmem %s1, %s265
        %s267 = sadd.s32 %s23, 1
        %s268 = smul.u32 2, %s267
        %s269 = smul.u32 2, %s23
        %v271 = vld [vmem:[%s255] sm:$0xf]
        %v272 = vld [vmem:[%s255 + $0x4] sm:$0xf]
        %v273 = vld [vmem:[%s266] sm:$0xf]
        %v274 = vld [vmem:[%s266 + $0x4] sm:$0xf]
        %v277 = vunpack.c.l.b16 %v271
        %v278 = vunpack.c.l.b16 %v272
        %v279 = vpack.c.b16 %v278, %v277
        %vm281 = vcmask 64512
        %282 = vst.msk [vmem:[#allocation2] sm:$0xff] %vm281, %v279
        %v285 = vunpack.c.l.b16 %v273
        %v286 = vunpack.c.l.b16 %v274
        %v287 = vpack.c.b16 %v286, %v285
        %289 = vst.msk [vmem:[#allocation2 + $0x8] sm:$0xff] %vm281, %v287
        %v290 = vld [vmem:[#allocation2] sm:$0xff]
        %v291 = vld [vmem:[#allocation2 + $0x8] sm:$0xff]
        %v292 = vld [vmem:[%s2] sm:$0xff]
        %v294 = vunpack.c.l.b16 %v292
        %v295 = vunpack.c.h.b16 %v292
        %v296 = vpack.c.b16 %v294, %v294
        %v297 = vpack.c.b16 %v295, %v295
        %v299 = vsel %vm281, %v290, 0
        %v302 = vsel %vm281, %v291, 0
        %vm304 = vcmask 1043456
        %v306 = vsel %vm304, %v296, 0
        %v309 = vsel %vm304, %v297, 0
        %311 = vmatprep.subr.bf16.mxu0 %v309
        %312 = vmatpush1.bf16.msra.mxu0 %v306
        %313 = vmatprep.subr.bf16.mxu0 0
        %314 = vmatpush1.bf16.msra.mxu0 0
        %315 = vmatprep.subr.bf16.mxu0 0
        %316 = vmatpush1.bf16.msra.mxu0 0
        %317 = vmatprep.subr.bf16.mxu0 0
        %318 = vmatpush1.bf16.msra.mxu0 0
        %319 = vmatprep.subr.bf16.mxu0 0
        %320 = vmatpush1.bf16.msra.mxu0 0
        %321 = vmatprep.subr.bf16.mxu0 0
        %322 = vmatpush1.bf16.msra.mxu0 0
        %323 = vmatprep.subr.bf16.mxu0 0
        %324 = vmatpush1.bf16.msra.mxu0 0
        %325 = vmatprep.subr.bf16.mxu0 0
        %326 = vmatpush1.bf16.msra.mxu0 0
        %327 = vmatprep.subr.bf16.mxu0 0
        %328 = vmatpush1.bf16.msra.mxu0 0
        %329 = vmatprep.subr.bf16.mxu0 0
        %330 = vmatpush1.bf16.msra.mxu0 0
        %331 = vmatprep.subr.bf16.mxu0 0
        %332 = vmatpush1.bf16.msra.mxu0 0
        %333 = vmatprep.subr.bf16.mxu0 0
        %334 = vmatpush1.bf16.msra.mxu0 0
        %335 = vmatprep.subr.bf16.mxu0 0
        %336 = vmatpush1.bf16.msra.mxu0 0
        %337 = vmatprep.subr.bf16.mxu0 0
        %338 = vmatpush1.bf16.msra.mxu0 0
        %339 = vmatprep.subr.bf16.mxu0 0
        %340 = vmatpush1.bf16.msra.mxu0 0
        %341 = vmatprep.subr.bf16.mxu0 0
        %342 = vmatpush1.bf16.msra.mxu0 0
        %343 = vmatprep.mubr.bf16.mxu0 0
        %344 = vmatmul.mubr.bf16.gmra.mrb[0].mxu0 %v299
        %v345 = vpop.f32.mrb[0].mxu0
        %v346 = vadd.f32 0.0, %v345
        %v347 = vpop.f32.mrb[0].mxu0
        %v348 = vadd.f32 0.0, %v347
        %v349 = vpop.f32.mrb[0].mxu0
        %v350 = vadd.f32 0.0, %v349
        %v351 = vpop.f32.mrb[0].mxu0
        %v352 = vadd.f32 0.0, %v351
        %353 = vmatprep.mubr.bf16.mxu0 0
        %354 = vmatmul.mubr.bf16.gmra.mrb[0].mxu0 %v302
        %v355 = vpop.f32.mrb[0].mxu0
        %v356 = vadd.f32 0.0, %v355
        %v357 = vpop.f32.mrb[0].mxu0
        %v358 = vadd.f32 0.0, %v357
        %v359 = vpop.f32.mrb[0].mxu0
        %v360 = vpop.f32.mrb[0].mxu0
        %361 = vdwg.mxu0
        %v362 = vadd.f32 %v346, 0.0
        %v363 = vadd.f32 %v350, 0.0
        %vm367 = vcmask 1046528
        %v368 = vrot.slane %v346, 1
        %v369 = vrot.slane %v350, 1
        %v370 = vsel %vm367, %v368, %v369
        %v371 = vrot.slane %v356, 1
        %v372 = vsel %vm367, %v369, %v371
        %373 = vrot.lane.b32.xlu0 %v370, 96
        %v374 = vpop.permute.xlu0 %373
        %375 = vrot.lane.b32.xlu0 %v372, 96
        %v376 = vpop.permute.xlu0 %375
        %v379 = vadd.f32 %v362, %v374
        %v380 = vadd.f32 %v363, %v376
        %vm381 = vcmask 1045504
        %v382 = vrot.slane %v346, 2
        %v383 = vrot.slane %v350, 2
        %v384 = vsel %vm381, %v382, %v383
        %v385 = vrot.slane %v356, 2
        %v386 = vsel %vm381, %v383, %v385
        %387 = vrot.lane.b32.xlu0 %v384, 64
        %v388 = vpop.permute.xlu0 %387
        %389 = vrot.lane.b32.xlu0 %v386, 64
        %v390 = vpop.permute.xlu0 %389
        %v393 = vadd.f32 %v379, %v388
        %v394 = vadd.f32 %v380, %v390
        %vm395 = vcmask 1044480
        %v396 = vrot.slane %v346, 3
        %v397 = vrot.slane %v350, 3
        %v398 = vsel %vm395, %v396, %v397
        %v399 = vrot.slane %v356, 3
        %v400 = vsel %vm395, %v397, %v399
        %401 = vrot.lane.b32.xlu0 %v398, 32
        %v402 = vpop.permute.xlu0 %401
        %403 = vrot.lane.b32.xlu0 %v400, 32
        %v404 = vpop.permute.xlu0 %403
        %v407 = vadd.f32 %v393, %v402
        %v408 = vadd.f32 %v394, %v404
        %v412 = vrot.slane %v348, 4
        %v413 = vrot.slane %v352, 4
        %v414 = vsel %vm304, %v412, %v413
        %v415 = vrot.slane %v358, 4
        %v416 = vsel %vm304, %v413, %v415
        %v419 = vadd.f32 %v407, %v414
        %v420 = vadd.f32 %v408, %v416
        %vm421 = vcmask 1042432
        %v422 = vrot.slane %v348, 5
        %v423 = vrot.slane %v352, 5
        %v424 = vsel %vm421, %v422, %v423
        %v425 = vrot.slane %v358, 5
        %v426 = vsel %vm421, %v423, %v425
        %427 = vrot.lane.b32.xlu0 %v424, 96
        %v428 = vpop.permute.xlu0 %427
        %429 = vrot.lane.b32.xlu0 %v426, 96
        %v430 = vpop.permute.xlu0 %429
        %v433 = vadd.f32 %v419, %v428
        %v434 = vadd.f32 %v420, %v430
        %vm435 = vcmask 1041408
        %v436 = vrot.slane %v348, 6
        %v437 = vrot.slane %v352, 6
        %v438 = vsel %vm435, %v436, %v437
        %v439 = vrot.slane %v358, 6
        %v440 = vsel %vm435, %v437, %v439
        %441 = vrot.lane.b32.xlu0 %v438, 64
        %v442 = vpop.permute.xlu0 %441
        %443 = vrot.lane.b32.xlu0 %v440, 64
        %v444 = vpop.permute.xlu0 %443
        %v447 = vadd.f32 %v433, %v442
        %v448 = vadd.f32 %v434, %v444
        %v449 = vld [vmem:[%s3] sm:$0x1]
        %v451 = vlaneseq
        %v452 = vshrl.u32 %v451, 7
        %v453 = vsub.s32 0, %v452
        %v454 = vrot.slane %v449, %v453
        %v456 = vadd.f32 %v447, %v454
        %v457 = vadd.f32 %v448, %v454
        %v458 = vpack.c.bf16 %v457, %v456
        %v460 = vunpack.c.l.b16 %v458
        %v461 = vunpack.c.h.b16 %v458
        %v462 = vpack.c.b16 %v460, %v460
        %v463 = vpack.c.b16 %v461, %v461
        %vm466 = vcmask 257024
        %467 = vst.msk [vmem:[%s246] sm:$0xf] %vm466, %v462
        %468 = vst.msk [vmem:[%s246 + $0x4] sm:$0xf] %vm466, %v463
        %s469 = sand.u32 %s140, 1
        %s470 = scalar_lea.sflag [#allocation4], %s469
        %s471 = sand.u32 %s140, 1
        %s472 = smul.addr %s471, 8
        %s473 = scalar_lea.vmem [#allocation3], %s472
        // Predicated region
        $region37: #{tpu_custom_call.1} parent=35 // pred_check
          %p474 = pneg %p150
        $region38: #{tpu_custom_call.1} parent=35 // pred_check_branch
          %476 = sbr.rel (%p474) target = $region40
        $region39: #{tpu_custom_call.1} parent=35 // pred_region
          %s477 = smul.u32 2, %s23
          %s479 = ssub.s32 128, 128
          %480 = vsyncadd %s470, %s479
          %s481 = smul.addr %s22, 2
          %s482 = sadd.s32 %s477, %s481
          %s483 = smul.addr %s482, 64
          %s484 = scalar_lea.hbm %s4, %s483
          %s485 = sshll.u32 %s473, 4
          %s486 = int_to_ptr.vmem [resolvable:$true] %s485
          %491 = dma.vmem_to_hbm [thread:$0]  %s486, 128, %s484, %s470, 64, 64, 4
        $region40: #{tpu_custom_call.1} parent=35 // pred_fallthru
          _
      $region36: #{tpu_custom_call.1} parent=5 // pred_fallthru
        _
      %p492 = scmp.le.s32.totalorder 2, %s13
      // Predicated region
      $region41: #{tpu_custom_call.1} parent=5 // pred_check
        %p493 = pneg %p492
      $region42: #{tpu_custom_call.1} parent=5 // pred_check_branch
        %495 = sbr.rel (%p493) target = $region44
      $region43: #{tpu_custom_call.1} parent=5 // pred_region
        %s496 = ssub.s32 %s13, 2
        // Predicated region
        $region45: #{tpu_custom_call.1} parent=43 // pred_check
          %p497 = pneg %p156
        $region46: #{tpu_custom_call.1} parent=43 // pred_check_branch
          %499 = sbr.rel (%p497) target = $region48
        $region47: #{tpu_custom_call.1} parent=43 // pred_region
          %s500 = sand.u32 %s141, 1
          %s501 = scalar_lea.sflag [#allocation4], %s500
          %s502 = sand.u32 %s141, 1
          %s503 = smul.addr %s502, 8
          %s504 = scalar_lea.vmem [#allocation3], %s503
          %505 = dma.done %s501, 128
        $region48: #{tpu_custom_call.1} parent=43 // pred_fallthru
          _
      $region44: #{tpu_custom_call.1} parent=5 // pred_fallthru
        _
    $region6: #{tpu_custom_call.1} parent=1 // loop_footer
      %s17 = sadd.s32 1, %s13
    $region7: #{tpu_custom_call.1} parent=1 // loop_footer_branch
      %12 = sbr.rel target = $region3
    $region8: #{tpu_custom_call.1} parent=1 // loop_exit
      _
    %506 = vsyncpa [#allocation4], 1
    %s507 = scalar_lea.sflag [#allocation4], 1
    %508 = vsyncpa %s507, 1

</llo_original>
